<compile_context>
chip_gen: v7x
topology: tpu7x:2x2x1
jax: 0.10.0
libtpu: 0.0.40
codegen_flags: <defaults>
</compile_context>

<pallas_src>
import functools

import jax
import jax.numpy as jnp
from jax.experimental import pallas as pl
from jax.experimental.pallas import tpu as pltpu


def _round_up(x, m):
    return (x + m - 1) // m * m


def _cdiv(a, b):
    return -(-a // b)


# ----------------------------- Pallas kernel --------------------------------

def _proj_ln_kernel(p_ref, w_ref, bgb_ref, o_ref, acc_ref, *, e_real):
    """One (tm, tk) step of  O = LayerNorm(P @ W + bias) * gamma + beta."""
    k = pl.program_id(1)

    @pl.when(k == 0)
    def _():
        acc_ref[...] = jnp.zeros_like(acc_ref)

    # Conv-as-matmul on the MXU: bf16 inputs, f32 accumulation.
    acc_ref[...] += jnp.dot(p_ref[...], w_ref[...],
                            preferred_element_type=jnp.float32)

    @pl.when(k == pl.num_programs(1) - 1)
    def _():
        bias = bgb_ref[0:1, :]
        gamma = bgb_ref[1:2, :]
        beta = bgb_ref[2:3, :]
        acc = acc_ref[...] + bias                       # (tm, Ep) + (1, Ep)

        # One-pass LayerNorm over the *real* embedding width e_real.  Padded E
        # columns are exactly zero (zero weight cols + zero bias), so the sums
        # over E_pad equal the sums over the real columns.
        inv_e = jnp.float32(1.0 / e_real)
        s1 = jnp.sum(acc, axis=-1, keepdims=True)
        s2 = jnp.sum(acc * acc, axis=-1, keepdims=True)
        mean = s1 * inv_e
        var = jnp.maximum(s2 * inv_e - mean * mean, 0.0)
        y = (acc - mean) * jax.lax.rsqrt(var + 1e-5)
        # gamma/beta are zero in padded columns -> padded output columns are 0.
        o_ref[...] = (y * gamma + beta).astype(o_ref.dtype)


def _choose_tm(m, tm_max=1024):
    if m >= 2 * tm_max:
        return tm_max                               # big M: MXU/roofline friendly
    return max(8, _round_up(_cdiv(m, 2), 8))        # small M: >= 2 steps for megacore


def _choose_tk(k128, e_pad, tm, budget_bytes=24 * 1024 * 1024):
    """Largest K tile (multiple of 128) keeping the VMEM working set under budget."""
    fixed = (2 * tm * e_pad * 2        # output tile, double-buffered bf16
             + tm * e_pad * 4          # f32 accumulator scratch
             + 2 * 8 * e_pad * 4)      # bias/gamma/beta operand
    per_k = 2 * tm * 2 + 2 * e_pad * 2  # P and W tiles, double-buffered bf16
    tk_max = max(128, (budget_bytes - fixed) // per_k // 128 * 128)
    if k128 <= tk_max:
        return k128
    nk = _cdiv(k128, tk_max)            # split K as evenly as possible (min padding)
    return _round_up(_cdiv(k128, nk), 128)


def proj_layernorm(patches, w_flat, bgb, *, e_real, tm, tk):
    """LayerNorm(patches @ w_flat + bias), tiled over (M, K), bf16 output.

    patches: (M_pad, K_pad) bf16,  M_pad % tm == 0, K_pad % tk == 0, tk % 128 == 0
    w_flat : (K_pad, E_pad) bf16,  E_pad % 128 == 0 (zero-padded rows/cols)
    bgb    : (8, E_pad) f32, rows 0/1/2 = bias/gamma/beta (zero in padded cols)
    """
    M, K = patches.shape
    Ep = w_flat.shape[1]
    assert M % tm == 0 and K % tk == 0 and tk % 128 == 0 and Ep % 128 == 0

    kernel = functools.partial(_proj_ln_kernel, e_real=e_real)
    return pl.pallas_call(
        kernel,
        out_shape=jax.ShapeDtypeStruct((M, Ep), jnp.bfloat16),
        grid=(M // tm, K // tk),
        in_specs=[
            pl.BlockSpec((tm, tk), lambda i, k: (i, k)),   # token tile (pipelined)
            pl.BlockSpec((tk, Ep), lambda i, k: (k, 0)),   # weight K-slab
            pl.BlockSpec((8, Ep), lambda i, k: (0, 0)),    # bias/gamma/beta (resident)
        ],
        out_specs=pl.BlockSpec((tm, Ep), lambda i, k: (i, 0)),
        scratch_shapes=[pltpu.VMEM((tm, Ep), jnp.float32)],
        compiler_params=pltpu.CompilerParams(
            dimension_semantics=("parallel", "arbitrary"),  # M sharded over v7x TCs
            vmem_limit_bytes=32 * 1024 * 1024,
        ),
    )(patches, w_flat, bgb)


# ------------------------- glue (plain JAX) ----------------------------------

def _crop_shift_pad(x, mode, image_size, half_patch):
    if mode == 'left-up':
        ch, cw, sh, sw = half_patch, half_patch, 0, 0
    elif mode == 'left-down':
        ch, cw, sh, sw = 0, half_patch, half_patch, 0
    elif mode == 'right-up':
        ch, cw, sh, sw = half_patch, 0, 0, half_patch
    else:  # right-down
        ch, cw, sh, sw = 0, 0, half_patch, half_patch
    t = image_size - half_patch
    crop = x[:, :, ch:ch + t, cw:cw + t]
    # pad_to_bounding_box fills the canvas with crop.min() (global min), exactly
    # as the reference PyTorch implementation does.
    pad_val = crop.min()
    canvas = jnp.full((x.shape[0], x.shape[1], image_size, image_size),
                      pad_val, dtype=x.dtype)
    return canvas.at[:, :, sh:sh + t, sw:sw + t].set(crop)


def shifted_concat(x, image_size, patch_size):
    half = patch_size // 2
    return jnp.concatenate(
        [x,
         _crop_shift_pad(x, 'left-up', image_size, half),
         _crop_shift_pad(x, 'left-down', image_size, half),
         _crop_shift_pad(x, 'right-up', image_size, half),
         _crop_shift_pad(x, 'right-down', image_size, half)],
        axis=1)


def im2col(x, kh, kw, stride, pad):
    """NCHW -> (B*Hout*Wout, C*kh*kw) with feature order (c, kh, kw)."""
    B, C, H, W = x.shape
    xp = jnp.pad(x, ((0, 0), (0, 0), (pad, pad), (pad, pad)))   # conv zero-padding
    Hp, Wp = H + 2 * pad, W + 2 * pad
    Hout = (Hp - kh) // stride + 1
    Wout = (Wp - kw) // stride + 1
    cols = []
    for i in range(kh):
        for j in range(kw):
            cols.append(xp[:, :, i:i + stride * (Hout - 1) + 1:stride,
                              j:j + stride * (Wout - 1) + 1:stride])
    patches = jnp.stack(cols, axis=2)                 # (B, C, kh*kw, Hout, Wout)
    patches = patches.reshape(B, C * kh * kw, Hout, Wout)
    patches = patches.transpose(0, 2, 3, 1).reshape(B * Hout * Wout, C * kh * kw)
    return patches, Hout, Wout


def overlap_patch_embed_spt(x, params, img_size, patch_size, stride, embed_dim,
                            tm_max=1024):
    """Forward pass of OverlapPatchEmbedSPT. Returns (tokens[bf16], H, W)."""
    # bf16 *before* shift/unfold halves the HBM traffic of the dominant (M, K)
    # buffer; accumulation stays f32 inside the kernel.
    xc = shifted_concat(x.astype(jnp.bfloat16), img_size, patch_size)  # (B,5C,H,W)
    # TODO(synk): fuse the shift-concat + unfold into the kernel with manual DMA
    # over the padded image (memory_space=pl.ANY) to kill the im2col round trip.
    patches, Hout, Wout = im2col(xc, patch_size, patch_size, stride,
                                 patch_size // 2)                      # (M, K) bf16

    M, K = patches.shape
    E = embed_dim
    Ep = _round_up(E, 128)
    K128 = _round_up(K, 128)
    tm = _choose_tm(M, tm_max)
    tk = _choose_tk(K128, Ep, tm)
    K_pad = _round_up(K128, tk)
    M_pad = _round_up(M, tm)

    patches = jnp.pad(patches, ((0, M_pad - M), (0, K_pad - K)))

    # Zero-pad weight rows/cols (keeps the LN-over-E_pad trick exact) and fold
    # bias/gamma/beta into one (8, Ep) operand -> a single resident DMA.
    w = jnp.pad(params['w_flat'].astype(jnp.bfloat16),
                ((0, K_pad - K), (0, Ep - E)))
    bgb = jnp.zeros((8, Ep), jnp.float32)
    bgb = bgb.at[0, :E].set(params['bias'].astype(jnp.float32))
    bgb = bgb.at[1, :E].set(params['gamma'].astype(jnp.float32))
    bgb = bgb.at[2, :E].set(params['beta'].astype(jnp.float32))

    out = proj_layernorm(patches, w, bgb, e_real=E, tm=tm, tk=tk)  # (M_pad, Ep) bf16

    B = x.shape[0]
    # TODO(synk): for E < 128, keep the lane-dense E_pad width for downstream
    # consumers instead of this relayout slice (it re-reads the whole output).
    out = out[:M, :E]
    return out.reshape(B, Hout * Wout, E), Hout, Wout


def init_params(key, in_chans, embed_dim, patch_size):
    """Matches the module's _init_weights: conv ~ N(0, sqrt(2/fan_out)),
    conv bias 0, LN weight 1, LN bias 0.  Stored unpadded; wrapper pads."""
    kh = kw = patch_size
    fan_out = kh * kw * embed_dim
    std = (2.0 / fan_out) ** 0.5
    w = jax.random.normal(key, (embed_dim, in_chans * 5, kh, kw), jnp.float32) * std
    return {
        'w_flat': w.reshape(embed_dim, -1).T.astype(jnp.bfloat16),  # (K, E)
        'bias': jnp.zeros((embed_dim,), jnp.float32),
        'gamma': jnp.ones((embed_dim,), jnp.float32),
        'beta': jnp.zeros((embed_dim,), jnp.float32),
    }


if __name__ == "__main__":
    key = jax.random.PRNGKey(0)
    k_x, k_w = jax.random.split(key)

    # small shapes consistent with the module
    B, C, IMG = 2, 4, 16
    PATCH, STRIDE, EMBED = 7, 4, 32

    x = jax.random.normal(k_x, (B, C, IMG, IMG), jnp.float32)
    params = init_params(k_w, C, EMBED, PATCH)

    @functools.partial(jax.jit, static_argnums=(2, 3, 4, 5))
    def fwd(x, params, img_size, patch_size, stride, embed_dim):
        tokens, _, _ = overlap_patch_embed_spt(x, params, img_size, patch_size,
                                               stride, embed_dim)
        return tokens

    tokens = fwd(x, params, IMG, PATCH, STRIDE, EMBED)
    jax.block_until_ready(tokens)

    pad = PATCH // 2
    H = W = (IMG + 2 * pad - PATCH) // STRIDE + 1
    assert tokens.shape == (B, H * W, EMBED), tokens.shape
    assert bool(jnp.all(jnp.isfinite(tokens.astype(jnp.float32))))

    # Pure-JAX reference on the same bf16 inputs (f32 math) as a sanity check.
    xc = shifted_concat(x.astype(jnp.bfloat16), IMG, PATCH)
    p_ref, _, _ = im2col(xc, PATCH, PATCH, STRIDE, pad)
    proj = jnp.dot(p_ref, params['w_flat'],
                   preferred_element_type=jnp.float32) + params['bias']
    mean = proj.mean(-1, keepdims=True)
    var = proj.var(-1, keepdims=True)
    ref = ((proj - mean) * jax.lax.rsqrt(var + 1e-5)
           * params['gamma'] + params['beta']).reshape(B, H * W, EMBED)
    err = float(jnp.max(jnp.abs(tokens.astype(jnp.float32) - ref)))
    assert err < 5e-2, err

    print("KERNEL_OK")
</pallas_src>

<mosaic_0001>
module attributes {stable_mosaic.version = 11 : i64} {
  func.func @_proj_ln_kernel(%arg0: i32, %arg1: i32, %arg2: memref<16x1024xbf16, #tpu.memory_space<vmem>>, %arg3: memref<1024x128xbf16, #tpu.memory_space<vmem>>, %arg4: memref<8x128xf32, #tpu.memory_space<vmem>>, %arg5: memref<16x128xbf16, #tpu.memory_space<vmem>>, %arg6: memref<16x128xf32, #tpu.memory_space<vmem>>) attributes {dimension_semantics = [#tpu.dimension_semantics<parallel>, #tpu.dimension_semantics<arbitrary>], iteration_bounds = array<i64: 2, 1>, scalar_prefetch = 0 : i64, scratch_operands = 1 : i64, tpu.core_type = #tpu.core_type<tc>, window_params = [{transform_indices = @transform_0, window_bounds = array<i64: 16, 1024>}, {transform_indices = @transform_1, window_bounds = array<i64: 1024, 128>}, {pipeline_mode = #tpu.pipeline_mode<synchronous>, transform_indices = @transform_2, window_bounds = array<i64: 8, 128>}, {transform_indices = @transform_3, window_bounds = array<i64: 16, 128>}]} {
    %c0_i32 = arith.constant 0 : i32
    %0 = arith.cmpi eq, %arg1, %c0_i32 : i32
    %1 = arith.extui %0 : i1 to i32
    %c0_i32_0 = arith.constant 0 : i32
    %2 = arith.cmpi ne, %1, %c0_i32_0 : i32
    scf.if %2 {
      %cst_10 = arith.constant 0.000000e+00 : f32
      %12 = vector.broadcast %cst_10 : f32 to vector<16x128xf32>
      %c0_11 = arith.constant 0 : index
      %c0_12 = arith.constant 0 : index
      %13 = vector.load %arg6[%c0_11, %c0_12] : memref<16x128xf32, #tpu.memory_space<vmem>>, vector<16x128xf32>
      tpu.vector_store %arg6[%c0_11, %c0_12], %12 {strides = array<i32>} : memref<16x128xf32, #tpu.memory_space<vmem>>, vector<16x128xf32>,
    } else {
    }
    %c0 = arith.constant 0 : index
    %c0_1 = arith.constant 0 : index
    %3 = vector.load %arg6[%c0, %c0_1] : memref<16x128xf32, #tpu.memory_space<vmem>>, vector<16x128xf32>
    %c0_2 = arith.constant 0 : index
    %c0_3 = arith.constant 0 : index
    %4 = vector.load %arg2[%c0_2, %c0_3] : memref<16x1024xbf16, #tpu.memory_space<vmem>>, vector<16x1024xbf16>
    %c0_4 = arith.constant 0 : index
    %c0_5 = arith.constant 0 : index
    %5 = vector.load %arg3[%c0_4, %c0_5] : memref<1024x128xbf16, #tpu.memory_space<vmem>>, vector<1024x128xbf16>
    %cst = arith.constant dense<0.000000e+00> : vector<16x128xf32>
    %6 = tpu.matmul %4, %5, %cst {dimension_numbers = #tpu.dot_dimension_numbers<[1], [0], [0], [1], [0, 0, 1, 1], [], []>} : vector<16x1024xbf16>, vector<1024x128xbf16>, vector<16x128xf32> -> vector<16x128xf32>
    %7 = arith.addf %3, %6 : vector<16x128xf32>
    %c0_6 = arith.constant 0 : index
    %c0_7 = arith.constant 0 : index
    %8 = vector.load %arg6[%c0_6, %c0_7] : memref<16x128xf32, #tpu.memory_space<vmem>>, vector<16x128xf32>
    tpu.vector_store %arg6[%c0_6, %c0_7], %7 {strides = array<i32>} : memref<16x128xf32, #tpu.memory_space<vmem>>, vector<16x128xf32>,
    %c0_i32_8 = arith.constant 0 : i32
    %9 = arith.cmpi eq, %arg1, %c0_i32_8 : i32
    %10 = arith.extui %9 : i1 to i32
    %c0_i32_9 = arith.constant 0 : i32
    %11 = arith.cmpi ne, %10, %c0_i32_9 : i32
    scf.if %11 {
      %c0_10 = arith.constant 0 : index
      %c0_11 = arith.constant 0 : index
      %12 = vector.load %arg4[%c0_10, %c0_11] : memref<8x128xf32, #tpu.memory_space<vmem>>, vector<1x128xf32>
      %c1 = arith.constant 1 : index
      %c0_12 = arith.constant 0 : index
      %13 = vector.load %arg4[%c1, %c0_12] : memref<8x128xf32, #tpu.memory_space<vmem>>, vector<1x128xf32>
      %c2 = arith.constant 2 : index
      %c0_13 = arith.constant 0 : index
      %14 = vector.load %arg4[%c2, %c0_13] : memref<8x128xf32, #tpu.memory_space<vmem>>, vector<1x128xf32>
      %c0_14 = arith.constant 0 : index
      %c0_15 = arith.constant 0 : index
      %15 = vector.load %arg6[%c0_14, %c0_15] : memref<16x128xf32, #tpu.memory_space<vmem>>, vector<16x128xf32>
      %16 = vector.broadcast %12 : vector<1x128xf32> to vector<16x128xf32>
      %17 = arith.addf %15, %16 : vector<16x128xf32>
      %cst_16 = arith.constant dense<0.000000e+00> : vector<16xf32>
      %18 = vector.multi_reduction <add>, %17, %cst_16 [1] : vector<16x128xf32> to vector<16xf32>
      %19 = vector.shape_cast %18 : vector<16xf32> to vector<16x1xf32>
      %20 = arith.mulf %17, %17 : vector<16x128xf32>
      %cst_17 = arith.constant dense<0.000000e+00> : vector<16xf32>
      %21 = vector.multi_reduction <add>, %20, %cst_17 [1] : vector<16x128xf32> to vector<16xf32>
      %22 = vector.shape_cast %21 : vector<16xf32> to vector<16x1xf32>
      %cst_18 = arith.constant 3.125000e-02 : f32
      %23 = vector.broadcast %cst_18 : f32 to vector<16x1xf32>
      %24 = arith.mulf %19, %23 : vector<16x1xf32>
      %cst_19 = arith.constant 3.125000e-02 : f32
      %25 = vector.broadcast %cst_19 : f32 to vector<16x1xf32>
      %26 = arith.mulf %22, %25 : vector<16x1xf32>
      %27 = arith.mulf %24, %24 : vector<16x1xf32>
      %28 = arith.subf %26, %27 : vector<16x1xf32>
      %cst_20 = arith.constant 0.000000e+00 : f32
      %29 = vector.broadcast %cst_20 : f32 to vector<16x1xf32>
      %30 = arith.maximumf %28, %29 : vector<16x1xf32>
      %31 = vector.broadcast %24 : vector<16x1xf32> to vector<16x128xf32>
      %32 = arith.subf %17, %31 : vector<16x128xf32>
      %cst_21 = arith.constant 9.99999974E-6 : f32
      %33 = vector.broadcast %cst_21 : f32 to vector<16x1xf32>
      %34 = arith.addf %30, %33 : vector<16x1xf32>
      %35 = math.rsqrt %34 : vector<16x1xf32>
      %36 = vector.broadcast %35 : vector<16x1xf32> to vector<16x128xf32>
      %37 = arith.mulf %32, %36 : vector<16x128xf32>
      %38 = vector.broadcast %13 : vector<1x128xf32> to vector<16x128xf32>
      %39 = arith.mulf %37, %38 : vector<16x128xf32>
      %40 = vector.broadcast %14 : vector<1x128xf32> to vector<16x128xf32>
      %41 = arith.addf %39, %40 : vector<16x128xf32>
      %42 = arith.truncf %41 : vector<16x128xf32> to vector<16x128xbf16>
      %c0_22 = arith.constant 0 : index
      %c0_23 = arith.constant 0 : index
      %43 = vector.load %arg5[%c0_22, %c0_23] : memref<16x128xbf16, #tpu.memory_space<vmem>>, vector<16x128xbf16>
      tpu.vector_store %arg5[%c0_22, %c0_23], %42 {strides = array<i32>} : memref<16x128xbf16, #tpu.memory_space<vmem>>, vector<16x128xbf16>,
    } else {
    }
    return
  }
  func.func @transform_0(%arg0: i32, %arg1: i32) -> (i32, i32) {
    %c0_i32 = arith.constant 0 : i32
    return %arg0, %arg1 : i32, i32
  }
  func.func @transform_1(%arg0: i32, %arg1: i32) -> (i32, i32) {
    %c0_i32 = arith.constant 0 : i32
    %c0_i32_0 = arith.constant 0 : i32
    return %arg1, %c0_i32 : i32, i32
  }
  func.func @transform_2(%arg0: i32, %arg1: i32) -> (i32, i32) {
    %c0_i32 = arith.constant 0 : i32
    %c0_i32_0 = arith.constant 0 : i32
    %c0_i32_1 = arith.constant 0 : i32
    return %c0_i32, %c0_i32_0 : i32, i32
  }
  func.func @transform_3(%arg0: i32, %arg1: i32) -> (i32, i32) {
    %c0_i32 = arith.constant 0 : i32
    %c0_i32_0 = arith.constant 0 : i32
    return %arg0, %c0_i32 : i32, i32
  }
}

</mosaic_0001>

<llo_original>
// kernel: fwd.1
$region0: #{fwd.1}
  #allocation0 [shape = 'u32[]', space=smem, size = 0x4, offset = 0x4, fixed_abs, tag = 'smem constant byte address 0x4 - core index']
  #allocation1 [shape = 'u32[144,128]{1,0:T(1,128)}', space=vmem, size = 0x12000, scoped, tag = 'internal scratch']
  #allocation2 [shape = 'f32[16,128]{1,0:T(8,128)}', space=vmem, size = 0x2000, scoped, tag = 'scratch operand']
  %s0 = inlined_call_operand.vmem [shape: bf16[32,1024], index: 0, kind: input, shape index: {}]
  %s1 = inlined_call_operand.vmem [shape: bf16[1024,128], index: 1, kind: input, shape index: {}]
  %s2 = inlined_call_operand.vmem [shape: f32[8,128], index: 2, kind: input, shape index: {}]
  %s3 = inlined_call_operand.hbm [shape: bf16[32,128], index: 3, kind: output, shape index: {}]
  %s4 = sld [smem:[#allocation0]]
  $region53: #{fwd.1} parent=0
    _
  %s6 = ssub.s32 1, %s4
  %s7 = scalar_select 0, %s6, %s4
  $region1: #{fwd.1} parent=0
    #allocation3 [shape = 'u8[8192]{0}', space=vmem, size = 0x2000, scoped, tag = 'output window, operand 0']
    #allocation4 [shape = 's32[2]{0}', space=sflag, size = 0x8, scoped, tag = 'scoped memory for fwd.1']
    %8 = vsyncpa [#allocation4], 0
    %s9 = scalar_lea.sflag [#allocation4], 1
    %10 = vsyncpa %s9, 0
    loop: start=0, step=1, limit=4
    $region2: #{fwd.1} parent=1 // loop_pre_header
      _
    $region3: #{fwd.1} parent=1 // loop_header
      %s12 = sphi 0, %s16
      %p13 = scmp.ge.s32.totalorder %s12, 4
      %s19 = sphi 0, %s31
      %s20 = sphi 0, %s27
      %s21 = sphi 0, %s19
      %s22 = sphi 0, %s20
      %s23 = sphi 0, %s21
      %s24 = sphi 0, %s22
      %s36 = sphi 0, %s38
      %s39 = sphi 0, %s36
      %s40 = sphi 0, %s39
      %s56 = sphi 0, %s40
      %s62 = sphi 0, %s64
      %s65 = sphi 0, %s62
      %s66 = sphi 0, %s65
      %s82 = sphi 0, %s66
      %s86 = sphi 0, %s86
      %s88 = sphi 0, %s86
      %s89 = sphi 0, %s88
      %s103 = sphi 0, %s89
      %s109 = sphi 0, %s111
      %s112 = sphi 0, %s109
      %s113 = sphi 0, %s112
      %s129 = sphi 0, %s113
    $region4: #{fwd.1} parent=1 // loop_header_branch
      %15 = sbr.rel (%p13) target = $region8
    $region5: #{fwd.1} parent=1 // loop_body
      %s17 = ssub.s32 %s12, 1
      %s18 = ssub.s32 %s12, 2
      %s25 = sadd.s32 1, %s20
      %p26 = scmp.ge.s32.totalorder %s25, 1
      %s27 = scalar_select %p26, 0, %s25
      %s28 = sadd.s32 1, %s19
      %s29 = scalar_select %p26, %s28, %s19
      %p30 = scmp.ge.s32.totalorder %s29, 2
      %s31 = scalar_select %p30, 0, %s29
      %s32 = ssub.s32 %s19, %s31
      %s33 = ssub.s32 %s20, %s27
      %s34 = sor.u32 %s32, %s33
      %p35 = scmp.eq.s32.totalorder %s34, 0
      %s37 = sadd.s32 %s36, 1
      %s38 = scalar_select %p35, %s36, %s37
      %p41 = pneg %p35
      %p42 = scmp.eq.s32.totalorder %s12, 1
      %p43 = por %p41, %p42
      %p44 = scmp.ne.s32.totalorder %s36, %s39
      %p45 = scmp.eq.s32.totalorder %s12, 0
      %p46 = por %p44, %p45
      %p47 = scmp.ne.s32.totalorder %s36, %s39
      %p48 = scmp.eq.s32.totalorder %s17, 1
      %p49 = por %p47, %p48
      %p50 = scmp.ne.s32.totalorder %s39, %s40
      %p51 = scmp.eq.s32.totalorder %s17, 0
      %p52 = por %p50, %p51
      %p53 = scmp.ne.s32.totalorder %s39, %s40
      %p54 = scmp.eq.s32.totalorder %s18, 1
      %p55 = por %p53, %p54
      %p57 = scmp.ne.s32.totalorder %s40, %s56
      %p58 = scmp.eq.s32.totalorder %s18, 0
      %p59 = por %p57, %p58
      %s60 = ssub.s32 %s20, %s27
      %p61 = scmp.eq.s32.totalorder %s60, 0
      %s63 = sadd.s32 %s62, 1
      %s64 = scalar_select %p61, %s62, %s63
      %p67 = pneg %p61
      %p68 = scmp.eq.s32.totalorder %s12, 1
      %p69 = por %p67, %p68
      %p70 = scmp.ne.s32.totalorder %s62, %s65
      %p71 = scmp.eq.s32.totalorder %s12, 0
      %p72 = por %p70, %p71
      %p73 = scmp.ne.s32.totalorder %s62, %s65
      %p74 = scmp.eq.s32.totalorder %s17, 1
      %p75 = por %p73, %p74
      %p76 = scmp.ne.s32.totalorder %s65, %s66
      %p77 = scmp.eq.s32.totalorder %s17, 0
      %p78 = por %p76, %p77
      %p79 = scmp.ne.s32.totalorder %s65, %s66
      %p80 = scmp.eq.s32.totalorder %s18, 1
      %p81 = por %p79, %p80
      %p83 = scmp.ne.s32.totalorder %s66, %s82
      %p84 = scmp.eq.s32.totalorder %s18, 0
      %p85 = por %p83, %p84
      %s87 = sadd.s32 %s86, 1
      %p90 = scmp.eq.s32.totalorder %s12, 1
      %p91 = scmp.ne.s32.totalorder %s86, %s88
      %p92 = scmp.eq.s32.totalorder %s12, 0
      %p93 = por %p91, %p92
      %p94 = scmp.ne.s32.totalorder %s86, %s88
      %p95 = scmp.eq.s32.totalorder %s17, 1
      %p96 = por %p94, %p95
      %p97 = scmp.ne.s32.totalorder %s88, %s89
      %p98 = scmp.eq.s32.totalorder %s17, 0
      %p99 = por %p97, %p98
      %p100 = scmp.ne.s32.totalorder %s88, %s89
      %p101 = scmp.eq.s32.totalorder %s18, 1
      %p102 = por %p100, %p101
      %p104 = scmp.ne.s32.totalorder %s89, %s103
      %p105 = scmp.eq.s32.totalorder %s18, 0
      %p106 = por %p104, %p105
      %s107 = ssub.s32 %s19, %s31
      %p108 = scmp.eq.s32.totalorder %s107, 0
      %s110 = sadd.s32 %s109, 1
      %s111 = scalar_select %p108, %s109, %s110
      %p114 = pneg %p108
      %p115 = scmp.eq.s32.totalorder %s12, 1
      %p116 = por %p114, %p115
      %p117 = scmp.ne.s32.totalorder %s109, %s112
      %p118 = scmp.eq.s32.totalorder %s12, 0
      %p119 = por %p117, %p118
      %p120 = scmp.ne.s32.totalorder %s109, %s112
      %p121 = scmp.eq.s32.totalorder %s17, 1
      %p122 = por %p120, %p121
      %p123 = scmp.ne.s32.totalorder %s112, %s113
      %p124 = scmp.eq.s32.totalorder %s17, 0
      %p125 = por %p123, %p124
      %p126 = scmp.ne.s32.totalorder %s112, %s113
      %p127 = scmp.eq.s32.totalorder %s18, 1
      %p128 = por %p126, %p127
      %p130 = scmp.ne.s32.totalorder %s113, %s129
      %p131 = scmp.eq.s32.totalorder %s18, 0
      %p132 = por %p130, %p131
      %p133 = scmp.le.s32.totalorder 1, %s12
      %p134 = scmp.lt.s32.totalorder %s12, 3
      %p135 = pnand %p133, %p134
      %p136 = pneg %p135
      // Predicated region
      $region9: #{fwd.1} parent=5 // pred_check
        _
      $region10: #{fwd.1} parent=5 // pred_check_branch
        %138 = sbr.rel (%p135) target = $region12
      $region11: #{fwd.1} parent=5 // pred_region
        %s139 = ssub.s32 %s12, 1
        // Predicated region
        $region13: #{fwd.1} parent=11 // pred_check
          %p140 = pneg %p78
        $region14: #{fwd.1} parent=11 // pred_check_branch
          %142 = sbr.rel (%p140) target = $region16
        $region15: #{fwd.1} parent=11 // pred_region
          %s143 = smul.u32 128, %s22
          %p144 = scmp.lt.s32.totalorder %s143, 127
          %s145 = scalar_select %p144, %s143, 127
          %s146 = smul.addr %s145, 4
          %s147 = scalar_lea.vmem %s1, %s146
          %s148 = smul.u32 128, %s22
        $region16: #{fwd.1} parent=11 // pred_fallthru
          _
        // Predicated region
        $region17: #{fwd.1} parent=11 // pred_check
          %p149 = pneg %p99
        $region18: #{fwd.1} parent=11 // pred_check_branch
          %151 = sbr.rel (%p149) target = $region20
        $region19: #{fwd.1} parent=11 // pred_region
          _
        $region20: #{fwd.1} parent=11 // pred_fallthru
          _
      $region12: #{fwd.1} parent=5 // pred_fallthru
        _
      %p152 = scmp.lt.s32.totalorder %s12, 2
      // Predicated region
      $region21: #{fwd.1} parent=5 // pred_check
        %p153 = pneg %p152
      $region22: #{fwd.1} parent=5 // pred_check_branch
        %155 = sbr.rel (%p153) target = $region24
      $region23: #{fwd.1} parent=5 // pred_region
        // Predicated region
        $region25: #{fwd.1} parent=23 // pred_check
          %p156 = pneg %p46
        $region26: #{fwd.1} parent=23 // pred_check_branch
          %158 = sbr.rel (%p156) target = $region28
        $region27: #{fwd.1} parent=23 // pred_region
          %s159 = smul.u32 2, %s19
          %s160 = smul.u32 8, %s20
          %p161 = scmp.lt.s32.totalorder %s159, 3
          %s162 = scalar_select %p161, %s159, 3
          %p163 = scmp.lt.s32.totalorder %s160, 7
          %s164 = scalar_select %p163, %s160, 7
          %s165 = smul.addr %s162, 8
          %s166 = sadd.s32 %s164, %s165
          %s167 = smul.addr %s166, 4
          %s168 = scalar_lea.vmem %s0, %s167
          %s169 = smul.u32 2, %s19
          %s170 = smul.u32 8, %s20
        $region28: #{fwd.1} parent=23 // pred_fallthru
          _
      $region24: #{fwd.1} parent=5 // pred_fallthru
        _
      %p171 = scmp.le.s32.totalorder 1, %s12
      %p172 = scmp.lt.s32.totalorder %s12, 3
      %p173 = pnand %p171, %p172
      %p174 = pneg %p173
      // Predicated region
      $region29: #{fwd.1} parent=5 // pred_check
        _
      $region30: #{fwd.1} parent=5 // pred_check_branch
        %176 = sbr.rel (%p173) target = $region32
      $region31: #{fwd.1} parent=5 // pred_region
        %s177 = ssub.s32 %s12, 1
        %s178 = smul.u32 2, %s21
        %s179 = smul.u32 8, %s22
        %p180 = scmp.lt.s32.totalorder %s178, 3
        %s181 = scalar_select %p180, %s178, 3
        %p182 = scmp.lt.s32.totalorder %s179, 7
        %s183 = scalar_select %p182, %s179, 7
        %s184 = smul.addr %s181, 8
        %s185 = sadd.s32 %s183, %s184
        %s186 = smul.addr %s185, 4
        %s187 = scalar_lea.vmem %s0, %s186
        %p188 = pneg %p52
        %p189 = pneg %p49
        %s190 = smul.u32 128, %s22
        %p191 = scmp.lt.s32.totalorder %s190, 127
        %s192 = scalar_select %p191, %s190, 127
        %s193 = smul.addr %s192, 4
        %s194 = scalar_lea.vmem %s1, %s193
        %p195 = pneg %p78
        %p196 = pneg %p75
        %p197 = pneg %p99
        %p198 = pneg %p96
        %p199 = pneg %p125
        %p200 = pneg %p122
        %s201 = sand.u32 %s112, 1
        %s202 = scalar_lea.sflag [#allocation4], %s201
        %s203 = sand.u32 %s112, 1
        %s204 = smul.addr %s203, 8
        %s205 = scalar_lea.vmem [#allocation3], %s204
        %s206 = smul.u32 2, %s21
        %s207 = smul.u32 8, %s22
        %p208 = scmp.lt.s32.totalorder %s206, 3
        %s209 = scalar_select %p208, %s206, 3
        %p210 = scmp.lt.s32.totalorder %s207, 7
        %s211 = scalar_select %p210, %s207, 7
        %s212 = smul.addr %s209, 8
        %s213 = sadd.s32 %s211, %s212
        %s214 = smul.addr %s213, 4
        %s215 = scalar_lea.vmem %s0, %s214
        %s216 = smul.u32 2, %s21
        %s217 = smul.u32 8, %s22
        %s218 = smul.u32 128, %s22
        %p219 = scmp.lt.s32.totalorder %s218, 127
        %s220 = scalar_select %p219, %s218, 127
        %s221 = smul.addr %s220, 4
        %s222 = scalar_lea.vmem %s1, %s221
        %s223 = smul.u32 128, %s22
        %s224 = smul.u32 2, %s21
        %p226 = scmp.eq.s32.totalorder %s22, 0
        // Predicated region
        $region33: #{fwd.1} parent=31 // pred_check
          %p227 = pneg %p226
        $region34: #{fwd.1} parent=31 // pred_check_branch
          %229 = sbr.rel (%p227) target = $region36
        $region35: #{fwd.1} parent=31 // pred_region
          %230 = vst [vmem:[#allocation2] sm:$0xff] 0.0
          %231 = vst [vmem:[#allocation2 + $0x8] sm:$0xff] 0.0
        $region36: #{fwd.1} parent=31 // pred_fallthru
          _
        %v232 = vld [vmem:[#allocation2] sm:$0xff]
        %v233 = vld [vmem:[#allocation2 + $0x8] sm:$0xff]
        %v234 = vld [vmem:[%s215] sm:$0xff]
        %v235 = vld [vmem:[%s215 + $0x8] sm:$0xff]
        %v236 = vld [vmem:[%s215 + $0x10] sm:$0xff]
        %v237 = vld [vmem:[%s215 + $0x18] sm:$0xff]
        %v238 = vld [vmem:[%s215 + $0x20] sm:$0xff]
        %v239 = vld [vmem:[%s215 + $0x28] sm:$0xff]
        %v240 = vld [vmem:[%s215 + $0x30] sm:$0xff]
        %v241 = vld [vmem:[%s215 + $0x38] sm:$0xff]
        %v242 = vld [vmem:[%s222] sm:$0xf]
        %v243 = vld [vmem:[%s222 + $0x4] sm:$0xf]
        %v244 = vld [vmem:[%s222 + $0x8] sm:$0xf]
        %v245 = vld [vmem:[%s222 + $0xc] sm:$0xf]
        %v246 = vld [vmem:[%s222 + $0x10] sm:$0xf]
        %v247 = vld [vmem:[%s222 + $0x14] sm:$0xf]
        %v248 = vld [vmem:[%s222 + $0x18] sm:$0xf]
        %v249 = vld [vmem:[%s222 + $0x1c] sm:$0xf]
        %v250 = vld [vmem:[%s222 + $0x20] sm:$0xf]
        %v251 = vld [vmem:[%s222 + $0x24] sm:$0xf]
        %v252 = vld [vmem:[%s222 + $0x28] sm:$0xf]
        %v253 = vld [vmem:[%s222 + $0x2c] sm:$0xf]
        %v254 = vld [vmem:[%s222 + $0x30] sm:$0xf]
        %v255 = vld [vmem:[%s222 + $0x34] sm:$0xf]
        %v256 = vld [vmem:[%s222 + $0x38] sm:$0xf]
        %v257 = vld [vmem:[%s222 + $0x3c] sm:$0xf]
        %v258 = vld [vmem:[%s222 + $0x40] sm:$0xf]
        %v259 = vld [vmem:[%s222 + $0x44] sm:$0xf]
        %v260 = vld [vmem:[%s222 + $0x48] sm:$0xf]
        %v261 = vld [vmem:[%s222 + $0x4c] sm:$0xf]
        %v262 = vld [vmem:[%s222 + $0x50] sm:$0xf]
        %v263 = vld [vmem:[%s222 + $0x54] sm:$0xf]
        %v264 = vld [vmem:[%s222 + $0x58] sm:$0xf]
        %v265 = vld [vmem:[%s222 + $0x5c] sm:$0xf]
        %v266 = vld [vmem:[%s222 + $0x60] sm:$0xf]
        %v267 = vld [vmem:[%s222 + $0x64] sm:$0xf]
        %v268 = vld [vmem:[%s222 + $0x68] sm:$0xf]
        %v269 = vld [vmem:[%s222 + $0x6c] sm:$0xf]
        %v270 = vld [vmem:[%s222 + $0x70] sm:$0xf]
        %v271 = vld [vmem:[%s222 + $0x74] sm:$0xf]
        %v272 = vld [vmem:[%s222 + $0x78] sm:$0xf]
        %v273 = vld [vmem:[%s222 + $0x7c] sm:$0xf]
        %v274 = vld [vmem:[%s222 + $0x80] sm:$0xf]
        %v275 = vld [vmem:[%s222 + $0x84] sm:$0xf]
        %v276 = vld [vmem:[%s222 + $0x88] sm:$0xf]
        %v277 = vld [vmem:[%s222 + $0x8c] sm:$0xf]
        %v278 = vld [vmem:[%s222 + $0x90] sm:$0xf]
        %v279 = vld [vmem:[%s222 + $0x94] sm:$0xf]
        %v280 = vld [vmem:[%s222 + $0x98] sm:$0xf]
        %v281 = vld [vmem:[%s222 + $0x9c] sm:$0xf]
        %v282 = vld [vmem:[%s222 + $0xa0] sm:$0xf]
        %v283 = vld [vmem:[%s222 + $0xa4] sm:$0xf]
        %v284 = vld [vmem:[%s222 + $0xa8] sm:$0xf]
        %v285 = vld [vmem:[%s222 + $0xac] sm:$0xf]
        %v286 = vld [vmem:[%s222 + $0xb0] sm:$0xf]
        %v287 = vld [vmem:[%s222 + $0xb4] sm:$0xf]
        %v288 = vld [vmem:[%s222 + $0xb8] sm:$0xf]
        %v289 = vld [vmem:[%s222 + $0xbc] sm:$0xf]
        %v290 = vld [vmem:[%s222 + $0xc0] sm:$0xf]
        %v291 = vld [vmem:[%s222 + $0xc4] sm:$0xf]
        %v292 = vld [vmem:[%s222 + $0xc8] sm:$0xf]
        %v293 = vld [vmem:[%s222 + $0xcc] sm:$0xf]
        %v294 = vld [vmem:[%s222 + $0xd0] sm:$0xf]
        %v295 = vld [vmem:[%s222 + $0xd4] sm:$0xf]
        %v296 = vld [vmem:[%s222 + $0xd8] sm:$0xf]
        %v297 = vld [vmem:[%s222 + $0xdc] sm:$0xf]
        %v298 = vld [vmem:[%s222 + $0xe0] sm:$0xf]
        %v299 = vld [vmem:[%s222 + $0xe4] sm:$0xf]
        %v300 = vld [vmem:[%s222 + $0xe8] sm:$0xf]
        %v301 = vld [vmem:[%s222 + $0xec] sm:$0xf]
        %v302 = vld [vmem:[%s222 + $0xf0] sm:$0xf]
        %v303 = vld [vmem:[%s222 + $0xf4] sm:$0xf]
        %v304 = vld [vmem:[%s222 + $0xf8] sm:$0xf]
        %v305 = vld [vmem:[%s222 + $0xfc] sm:$0xf]
        %v306 = vld [vmem:[%s222 + $0x100] sm:$0xf]
        %v307 = vld [vmem:[%s222 + $0x104] sm:$0xf]
        %v308 = vld [vmem:[%s222 + $0x108] sm:$0xf]
        %v309 = vld [vmem:[%s222 + $0x10c] sm:$0xf]
        %v310 = vld [vmem:[%s222 + $0x110] sm:$0xf]
        %v311 = vld [vmem:[%s222 + $0x114] sm:$0xf]
        %v312 = vld [vmem:[%s222 + $0x118] sm:$0xf]
        %v313 = vld [vmem:[%s222 + $0x11c] sm:$0xf]
        %v314 = vld [vmem:[%s222 + $0x120] sm:$0xf]
        %v315 = vld [vmem:[%s222 + $0x124] sm:$0xf]
        %v316 = vld [vmem:[%s222 + $0x128] sm:$0xf]
        %v317 = vld [vmem:[%s222 + $0x12c] sm:$0xf]
        %v318 = vld [vmem:[%s222 + $0x130] sm:$0xf]
        %v319 = vld [vmem:[%s222 + $0x134] sm:$0xf]
        %v320 = vld [vmem:[%s222 + $0x138] sm:$0xf]
        %v321 = vld [vmem:[%s222 + $0x13c] sm:$0xf]
        %v322 = vld [vmem:[%s222 + $0x140] sm:$0xf]
        %v323 = vld [vmem:[%s222 + $0x144] sm:$0xf]
        %v324 = vld [vmem:[%s222 + $0x148] sm:$0xf]
        %v325 = vld [vmem:[%s222 + $0x14c] sm:$0xf]
        %v326 = vld [vmem:[%s222 + $0x150] sm:$0xf]
        %v327 = vld [vmem:[%s222 + $0x154] sm:$0xf]
        %v328 = vld [vmem:[%s222 + $0x158] sm:$0xf]
        %v329 = vld [vmem:[%s222 + $0x15c] sm:$0xf]
        %v330 = vld [vmem:[%s222 + $0x160] sm:$0xf]
        %v331 = vld [vmem:[%s222 + $0x164] sm:$0xf]
        %v332 = vld [vmem:[%s222 + $0x168] sm:$0xf]
        %v333 = vld [vmem:[%s222 + $0x16c] sm:$0xf]
        %v334 = vld [vmem:[%s222 + $0x170] sm:$0xf]
        %v335 = vld [vmem:[%s222 + $0x174] sm:$0xf]
        %v336 = vld [vmem:[%s222 + $0x178] sm:$0xf]
        %v337 = vld [vmem:[%s222 + $0x17c] sm:$0xf]
        %v338 = vld [vmem:[%s222 + $0x180] sm:$0xf]
        %v339 = vld [vmem:[%s222 + $0x184] sm:$0xf]
        %v340 = vld [vmem:[%s222 + $0x188] sm:$0xf]
        %v341 = vld [vmem:[%s222 + $0x18c] sm:$0xf]
        %v342 = vld [vmem:[%s222 + $0x190] sm:$0xf]
        %v343 = vld [vmem:[%s222 + $0x194] sm:$0xf]
        %v344 = vld [vmem:[%s222 + $0x198] sm:$0xf]
        %v345 = vld [vmem:[%s222 + $0x19c] sm:$0xf]
        %v346 = vld [vmem:[%s222 + $0x1a0] sm:$0xf]
        %v347 = vld [vmem:[%s222 + $0x1a4] sm:$0xf]
        %v348 = vld [vmem:[%s222 + $0x1a8] sm:$0xf]
        %v349 = vld [vmem:[%s222 + $0x1ac] sm:$0xf]
        %v350 = vld [vmem:[%s222 + $0x1b0] sm:$0xf]
        %v351 = vld [vmem:[%s222 + $0x1b4] sm:$0xf]
        %v352 = vld [vmem:[%s222 + $0x1b8] sm:$0xf]
        %v353 = vld [vmem:[%s222 + $0x1bc] sm:$0xf]
        %v354 = vld [vmem:[%s222 + $0x1c0] sm:$0xf]
        %v355 = vld [vmem:[%s222 + $0x1c4] sm:$0xf]
        %v356 = vld [vmem:[%s222 + $0x1c8] sm:$0xf]
        %v357 = vld [vmem:[%s222 + $0x1cc] sm:$0xf]
        %v358 = vld [vmem:[%s222 + $0x1d0] sm:$0xf]
        %v359 = vld [vmem:[%s222 + $0x1d4] sm:$0xf]
        %v360 = vld [vmem:[%s222 + $0x1d8] sm:$0xf]
        %v361 = vld [vmem:[%s222 + $0x1dc] sm:$0xf]
        %v362 = vld [vmem:[%s222 + $0x1e0] sm:$0xf]
        %v363 = vld [vmem:[%s222 + $0x1e4] sm:$0xf]
        %v364 = vld [vmem:[%s222 + $0x1e8] sm:$0xf]
        %v365 = vld [vmem:[%s222 + $0x1ec] sm:$0xf]
        %v366 = vld [vmem:[%s222 + $0x1f0] sm:$0xf]
        %v367 = vld [vmem:[%s222 + $0x1f4] sm:$0xf]
        %v368 = vld [vmem:[%s222 + $0x1f8] sm:$0xf]
        %v369 = vld [vmem:[%s222 + $0x1fc] sm:$0xf]
        %v378 = vunpack.c.l.b16 %v234
        %v379 = vunpack.c.h.b16 %v234
        %v380 = vunpack.c.l.b16 %v235
        %v381 = vunpack.c.h.b16 %v235
        %v382 = vunpack.c.l.b16 %v236
        %v383 = vunpack.c.h.b16 %v236
        %v384 = vunpack.c.l.b16 %v237
        %v385 = vunpack.c.h.b16 %v237
        %v386 = vunpack.c.l.b16 %v238
        %v387 = vunpack.c.h.b16 %v238
        %v388 = vunpack.c.l.b16 %v239
        %v389 = vunpack.c.h.b16 %v239
        %v390 = vunpack.c.l.b16 %v240
        %v391 = vunpack.c.h.b16 %v240
        %v392 = vunpack.c.l.b16 %v241
        %v393 = vunpack.c.h.b16 %v241
        %v394 = vpack.c.b16 %v386, %v378
        %v395 = vpack.c.b16 %v387, %v379
        %v396 = vpack.c.b16 %v388, %v380
        %v397 = vpack.c.b16 %v389, %v381
        %v398 = vpack.c.b16 %v390, %v382
        %v399 = vpack.c.b16 %v391, %v383
        %v400 = vpack.c.b16 %v392, %v384
        %v401 = vpack.c.b16 %v393, %v385
        %v538 = vunpack.c.l.b16 %v242
        %v539 = vunpack.c.l.b16 %v243
        %v540 = vunpack.c.l.b16 %v244
        %v541 = vunpack.c.l.b16 %v245
        %v542 = vunpack.c.l.b16 %v246
        %v543 = vunpack.c.l.b16 %v247
        %v544 = vunpack.c.l.b16 %v248
        %v545 = vunpack.c.l.b16 %v249
        %v546 = vunpack.c.l.b16 %v250
        %v547 = vunpack.c.l.b16 %v251
        %v548 = vunpack.c.l.b16 %v252
        %v549 = vunpack.c.l.b16 %v253
        %v550 = vunpack.c.l.b16 %v254
        %v551 = vunpack.c.l.b16 %v255
        %v552 = vunpack.c.l.b16 %v256
        %v553 = vunpack.c.l.b16 %v257
        %v554 = vunpack.c.l.b16 %v258
        %v555 = vunpack.c.l.b16 %v259
        %v556 = vunpack.c.l.b16 %v260
        %v557 = vunpack.c.l.b16 %v261
        %v558 = vunpack.c.l.b16 %v262
        %v559 = vunpack.c.l.b16 %v263
        %v560 = vunpack.c.l.b16 %v264
        %v561 = vunpack.c.l.b16 %v265
        %v562 = vunpack.c.l.b16 %v266
        %v563 = vunpack.c.l.b16 %v267
        %v564 = vunpack.c.l.b16 %v268
        %v565 = vunpack.c.l.b16 %v269
        %v566 = vunpack.c.l.b16 %v270
        %v567 = vunpack.c.l.b16 %v271
        %v568 = vunpack.c.l.b16 %v272
        %v569 = vunpack.c.l.b16 %v273
        %v570 = vunpack.c.l.b16 %v274
        %v571 = vunpack.c.l.b16 %v275
        %v572 = vunpack.c.l.b16 %v276
        %v573 = vunpack.c.l.b16 %v277
        %v574 = vunpack.c.l.b16 %v278
        %v575 = vunpack.c.l.b16 %v279
        %v576 = vunpack.c.l.b16 %v280
        %v577 = vunpack.c.l.b16 %v281
        %v578 = vunpack.c.l.b16 %v282
        %v579 = vunpack.c.l.b16 %v283
        %v580 = vunpack.c.l.b16 %v284
        %v581 = vunpack.c.l.b16 %v285
        %v582 = vunpack.c.l.b16 %v286
        %v583 = vunpack.c.l.b16 %v287
        %v584 = vunpack.c.l.b16 %v288
        %v585 = vunpack.c.l.b16 %v289
        %v586 = vunpack.c.l.b16 %v290
        %v587 = vunpack.c.l.b16 %v291
        %v588 = vunpack.c.l.b16 %v292
        %v589 = vunpack.c.l.b16 %v293
        %v590 = vunpack.c.l.b16 %v294
        %v591 = vunpack.c.l.b16 %v295
        %v592 = vunpack.c.l.b16 %v296
        %v593 = vunpack.c.l.b16 %v297
        %v594 = vunpack.c.l.b16 %v298
        %v595 = vunpack.c.l.b16 %v299
        %v596 = vunpack.c.l.b16 %v300
        %v597 = vunpack.c.l.b16 %v301
        %v598 = vunpack.c.l.b16 %v302
        %v599 = vunpack.c.l.b16 %v303
        %v600 = vunpack.c.l.b16 %v304
        %v601 = vunpack.c.l.b16 %v305
        %v602 = vunpack.c.l.b16 %v306
        %v603 = vunpack.c.l.b16 %v307
        %v604 = vunpack.c.l.b16 %v308
        %v605 = vunpack.c.l.b16 %v309
        %v606 = vunpack.c.l.b16 %v310
        %v607 = vunpack.c.l.b16 %v311
        %v608 = vunpack.c.l.b16 %v312
        %v609 = vunpack.c.l.b16 %v313
        %v610 = vunpack.c.l.b16 %v314
        %v611 = vunpack.c.l.b16 %v315
        %v612 = vunpack.c.l.b16 %v316
        %v613 = vunpack.c.l.b16 %v317
        %v614 = vunpack.c.l.b16 %v318
        %v615 = vunpack.c.l.b16 %v319
        %v616 = vunpack.c.l.b16 %v320
        %v617 = vunpack.c.l.b16 %v321
        %v618 = vunpack.c.l.b16 %v322
        %v619 = vunpack.c.l.b16 %v323
        %v620 = vunpack.c.l.b16 %v324
        %v621 = vunpack.c.l.b16 %v325
        %v622 = vunpack.c.l.b16 %v326
        %v623 = vunpack.c.l.b16 %v327
        %v624 = vunpack.c.l.b16 %v328
        %v625 = vunpack.c.l.b16 %v329
        %v626 = vunpack.c.l.b16 %v330
        %v627 = vunpack.c.l.b16 %v331
        %v628 = vunpack.c.l.b16 %v332
        %v629 = vunpack.c.l.b16 %v333
        %v630 = vunpack.c.l.b16 %v334
        %v631 = vunpack.c.l.b16 %v335
        %v632 = vunpack.c.l.b16 %v336
        %v633 = vunpack.c.l.b16 %v337
        %v634 = vunpack.c.l.b16 %v338
        %v635 = vunpack.c.l.b16 %v339
        %v636 = vunpack.c.l.b16 %v340
        %v637 = vunpack.c.l.b16 %v341
        %v638 = vunpack.c.l.b16 %v342
        %v639 = vunpack.c.l.b16 %v343
        %v640 = vunpack.c.l.b16 %v344
        %v641 = vunpack.c.l.b16 %v345
        %v642 = vunpack.c.l.b16 %v346
        %v643 = vunpack.c.l.b16 %v347
        %v644 = vunpack.c.l.b16 %v348
        %v645 = vunpack.c.l.b16 %v349
        %v646 = vunpack.c.l.b16 %v350
        %v647 = vunpack.c.l.b16 %v351
        %v648 = vunpack.c.l.b16 %v352
        %v649 = vunpack.c.l.b16 %v353
        %v650 = vunpack.c.l.b16 %v354
        %v651 = vunpack.c.l.b16 %v355
        %v652 = vunpack.c.l.b16 %v356
        %v653 = vunpack.c.l.b16 %v357
        %v654 = vunpack.c.l.b16 %v358
        %v655 = vunpack.c.l.b16 %v359
        %v656 = vunpack.c.l.b16 %v360
        %v657 = vunpack.c.l.b16 %v361
        %v658 = vunpack.c.l.b16 %v362
        %v659 = vunpack.c.l.b16 %v363
        %v660 = vunpack.c.l.b16 %v364
        %v661 = vunpack.c.l.b16 %v365
        %v662 = vunpack.c.l.b16 %v366
        %v663 = vunpack.c.l.b16 %v367
        %v664 = vunpack.c.l.b16 %v368
        %v665 = vunpack.c.l.b16 %v369
        %v666 = vpack.c.b16 %v539, %v538
        %v667 = vpack.c.b16 %v541, %v540
        %v668 = vpack.c.b16 %v543, %v542
        %v669 = vpack.c.b16 %v545, %v544
        %v670 = vpack.c.b16 %v547, %v546
        %v671 = vpack.c.b16 %v549, %v548
        %v672 = vpack.c.b16 %v551, %v550
        %v673 = vpack.c.b16 %v553, %v552
        %v674 = vpack.c.b16 %v555, %v554
        %v675 = vpack.c.b16 %v557, %v556
        %v676 = vpack.c.b16 %v559, %v558
        %v677 = vpack.c.b16 %v561, %v560
        %v678 = vpack.c.b16 %v563, %v562
        %v679 = vpack.c.b16 %v565, %v564
        %v680 = vpack.c.b16 %v567, %v566
        %v681 = vpack.c.b16 %v569, %v568
        %v682 = vpack.c.b16 %v571, %v570
        %v683 = vpack.c.b16 %v573, %v572
        %v684 = vpack.c.b16 %v575, %v574
        %v685 = vpack.c.b16 %v577, %v576
        %v686 = vpack.c.b16 %v579, %v578
        %v687 = vpack.c.b16 %v581, %v580
        %v688 = vpack.c.b16 %v583, %v582
        %v689 = vpack.c.b16 %v585, %v584
        %v690 = vpack.c.b16 %v587, %v586
        %v691 = vpack.c.b16 %v589, %v588
        %v692 = vpack.c.b16 %v591, %v590
        %v693 = vpack.c.b16 %v593, %v592
        %v694 = vpack.c.b16 %v595, %v594
        %v695 = vpack.c.b16 %v597, %v596
        %v696 = vpack.c.b16 %v599, %v598
        %v697 = vpack.c.b16 %v601, %v600
        %v698 = vpack.c.b16 %v603, %v602
        %v699 = vpack.c.b16 %v605, %v604
        %v700 = vpack.c.b16 %v607, %v606
        %v701 = vpack.c.b16 %v609, %v608
        %v702 = vpack.c.b16 %v611, %v610
        %v703 = vpack.c.b16 %v613, %v612
        %v704 = vpack.c.b16 %v615, %v614
        %v705 = vpack.c.b16 %v617, %v616
        %v706 = vpack.c.b16 %v619, %v618
        %v707 = vpack.c.b16 %v621, %v620
        %v708 = vpack.c.b16 %v623, %v622
        %v709 = vpack.c.b16 %v625, %v624
        %v710 = vpack.c.b16 %v627, %v626
        %v711 = vpack.c.b16 %v629, %v628
        %v712 = vpack.c.b16 %v631, %v630
        %v713 = vpack.c.b16 %v633, %v632
        %v714 = vpack.c.b16 %v635, %v634
        %v715 = vpack.c.b16 %v637, %v636
        %v716 = vpack.c.b16 %v639, %v638
        %v717 = vpack.c.b16 %v641, %v640
        %v718 = vpack.c.b16 %v643, %v642
        %v719 = vpack.c.b16 %v645, %v644
        %v720 = vpack.c.b16 %v647, %v646
        %v721 = vpack.c.b16 %v649, %v648
        %v722 = vpack.c.b16 %v651, %v650
        %v723 = vpack.c.b16 %v653, %v652
        %v724 = vpack.c.b16 %v655, %v654
        %v725 = vpack.c.b16 %v657, %v656
        %v726 = vpack.c.b16 %v659, %v658
        %v727 = vpack.c.b16 %v661, %v660
        %v728 = vpack.c.b16 %v663, %v662
        %v729 = vpack.c.b16 %v665, %v664
        %794 = vmatprep.subr.bf16.mxu0 0
        %795 = vmatpush1.bf16.msra.mxu0 %v666
        %796 = vmatprep.subr.bf16.mxu0 0
        %797 = vmatpush1.bf16.msra.mxu0 %v667
        %798 = vmatprep.subr.bf16.mxu0 0
        %799 = vmatpush1.bf16.msra.mxu0 %v668
        %800 = vmatprep.subr.bf16.mxu0 0
        %801 = vmatpush1.bf16.msra.mxu0 %v669
        %802 = vmatprep.subr.bf16.mxu0 0
        %803 = vmatpush1.bf16.msra.mxu0 %v670
        %804 = vmatprep.subr.bf16.mxu0 0
        %805 = vmatpush1.bf16.msra.mxu0 %v671
        %806 = vmatprep.subr.bf16.mxu0 0
        %807 = vmatpush1.bf16.msra.mxu0 %v672
        %808 = vmatprep.subr.bf16.mxu0 0
        %809 = vmatpush1.bf16.msra.mxu0 %v673
        %810 = vmatprep.subr.bf16.mxu0 0
        %811 = vmatpush1.bf16.msra.mxu0 %v674
        %812 = vmatprep.subr.bf16.mxu0 0
        %813 = vmatpush1.bf16.msra.mxu0 %v675
        %814 = vmatprep.subr.bf16.mxu0 0
        %815 = vmatpush1.bf16.msra.mxu0 %v676
        %816 = vmatprep.subr.bf16.mxu0 0
        %817 = vmatpush1.bf16.msra.mxu0 %v677
        %818 = vmatprep.subr.bf16.mxu0 0
        %819 = vmatpush1.bf16.msra.mxu0 %v678
        %820 = vmatprep.subr.bf16.mxu0 0
        %821 = vmatpush1.bf16.msra.mxu0 %v679
        %822 = vmatprep.subr.bf16.mxu0 0
        %823 = vmatpush1.bf16.msra.mxu0 %v680
        %824 = vmatprep.subr.bf16.mxu0 0
        %825 = vmatpush1.bf16.msra.mxu0 %v681
        %826 = vmatprep.mubr.bf16.mxu0 %v395
        %827 = vmatmul.mubr.bf16.gmra.mrb[0].mxu0 %v394
        %v828 = vpop.f32.mrb[0].mxu0
        %v829 = vadd.f32 0.0, %v828
        %v830 = vpop.f32.mrb[0].mxu0
        %v831 = vpop.f32.mrb[0].mxu0
        %v832 = vadd.f32 0.0, %v831
        %v833 = vpop.f32.mrb[0].mxu0
        %834 = vdwg.mxu0
        %835 = vmatprep.subr.bf16.mxu0 0
        %836 = vmatpush1.bf16.msra.mxu0 %v682
        %837 = vmatprep.subr.bf16.mxu0 0
        %838 = vmatpush1.bf16.msra.mxu0 %v683
        %839 = vmatprep.subr.bf16.mxu0 0
        %840 = vmatpush1.bf16.msra.mxu0 %v684
        %841 = vmatprep.subr.bf16.mxu0 0
        %842 = vmatpush1.bf16.msra.mxu0 %v685
        %843 = vmatprep.subr.bf16.mxu0 0
        %844 = vmatpush1.bf16.msra.mxu0 %v686
        %845 = vmatprep.subr.bf16.mxu0 0
        %846 = vmatpush1.bf16.msra.mxu0 %v687
        %847 = vmatprep.subr.bf16.mxu0 0
        %848 = vmatpush1.bf16.msra.mxu0 %v688
        %849 = vmatprep.subr.bf16.mxu0 0
        %850 = vmatpush1.bf16.msra.mxu0 %v689
        %851 = vmatprep.subr.bf16.mxu0 0
        %852 = vmatpush1.bf16.msra.mxu0 %v690
        %853 = vmatprep.subr.bf16.mxu0 0
        %854 = vmatpush1.bf16.msra.mxu0 %v691
        %855 = vmatprep.subr.bf16.mxu0 0
        %856 = vmatpush1.bf16.msra.mxu0 %v692
        %857 = vmatprep.subr.bf16.mxu0 0
        %858 = vmatpush1.bf16.msra.mxu0 %v693
        %859 = vmatprep.subr.bf16.mxu0 0
        %860 = vmatpush1.bf16.msra.mxu0 %v694
        %861 = vmatprep.subr.bf16.mxu0 0
        %862 = vmatpush1.bf16.msra.mxu0 %v695
        %863 = vmatprep.subr.bf16.mxu0 0
        %864 = vmatpush1.bf16.msra.mxu0 %v696
        %865 = vmatprep.subr.bf16.mxu0 0
        %866 = vmatpush1.bf16.msra.mxu0 %v697
        %867 = vmatprep.mubr.bf16.mxu0 %v397
        %868 = vmatmul.mubr.bf16.gmra.mrb[0].mxu0 %v396
        %v869 = vpop.f32.mrb[0].mxu0
        %v870 = vadd.f32 %v829, %v869
        %v871 = vpop.f32.mrb[0].mxu0
        %v872 = vpop.f32.mrb[0].mxu0
        %v873 = vadd.f32 %v832, %v872
        %v874 = vpop.f32.mrb[0].mxu0
        %875 = vdwg.mxu0
        %876 = vmatprep.subr.bf16.mxu0 0
        %877 = vmatpush1.bf16.msra.mxu0 %v698
        %878 = vmatprep.subr.bf16.mxu0 0
        %879 = vmatpush1.bf16.msra.mxu0 %v699
        %880 = vmatprep.subr.bf16.mxu0 0
        %881 = vmatpush1.bf16.msra.mxu0 %v700
        %882 = vmatprep.subr.bf16.mxu0 0
        %883 = vmatpush1.bf16.msra.mxu0 %v701
        %884 = vmatprep.subr.bf16.mxu0 0
        %885 = vmatpush1.bf16.msra.mxu0 %v702
        %886 = vmatprep.subr.bf16.mxu0 0
        %887 = vmatpush1.bf16.msra.mxu0 %v703
        %888 = vmatprep.subr.bf16.mxu0 0
        %889 = vmatpush1.bf16.msra.mxu0 %v704
        %890 = vmatprep.subr.bf16.mxu0 0
        %891 = vmatpush1.bf16.msra.mxu0 %v705
        %892 = vmatprep.subr.bf16.mxu0 0
        %893 = vmatpush1.bf16.msra.mxu0 %v706
        %894 = vmatprep.subr.bf16.mxu0 0
        %895 = vmatpush1.bf16.msra.mxu0 %v707
        %896 = vmatprep.subr.bf16.mxu0 0
        %897 = vmatpush1.bf16.msra.mxu0 %v708
        %898 = vmatprep.subr.bf16.mxu0 0
        %899 = vmatpush1.bf16.msra.mxu0 %v709
        %900 = vmatprep.subr.bf16.mxu0 0
        %901 = vmatpush1.bf16.msra.mxu0 %v710
        %902 = vmatprep.subr.bf16.mxu0 0
        %903 = vmatpush1.bf16.msra.mxu0 %v711
        %904 = vmatprep.subr.bf16.mxu0 0
        %905 = vmatpush1.bf16.msra.mxu0 %v712
        %906 = vmatprep.subr.bf16.mxu0 0
        %907 = vmatpush1.bf16.msra.mxu0 %v713
        %908 = vmatprep.mubr.bf16.mxu0 %v399
        %909 = vmatmul.mubr.bf16.gmra.mrb[0].mxu0 %v398
        %v910 = vpop.f32.mrb[0].mxu0
        %v911 = vadd.f32 %v870, %v910
        %v912 = vpop.f32.mrb[0].mxu0
        %v913 = vpop.f32.mrb[0].mxu0
        %v914 = vadd.f32 %v873, %v913
        %v915 = vpop.f32.mrb[0].mxu0
        %916 = vdwg.mxu0
        %917 = vmatprep.subr.bf16.mxu0 0
        %918 = vmatpush1.bf16.msra.mxu0 %v714
        %919 = vmatprep.subr.bf16.mxu0 0
        %920 = vmatpush1.bf16.msra.mxu0 %v715
        %921 = vmatprep.subr.bf16.mxu0 0
        %922 = vmatpush1.bf16.msra.mxu0 %v716
        %923 = vmatprep.subr.bf16.mxu0 0
        %924 = vmatpush1.bf16.msra.mxu0 %v717
        %925 = vmatprep.subr.bf16.mxu0 0
        %926 = vmatpush1.bf16.msra.mxu0 %v718
        %927 = vmatprep.subr.bf16.mxu0 0
        %928 = vmatpush1.bf16.msra.mxu0 %v719
        %929 = vmatprep.subr.bf16.mxu0 0
        %930 = vmatpush1.bf16.msra.mxu0 %v720
        %931 = vmatprep.subr.bf16.mxu0 0
        %932 = vmatpush1.bf16.msra.mxu0 %v721
        %933 = vmatprep.subr.bf16.mxu0 0
        %934 = vmatpush1.bf16.msra.mxu0 %v722
        %935 = vmatprep.subr.bf16.mxu0 0
        %936 = vmatpush1.bf16.msra.mxu0 %v723
        %937 = vmatprep.subr.bf16.mxu0 0
        %938 = vmatpush1.bf16.msra.mxu0 %v724
        %939 = vmatprep.subr.bf16.mxu0 0
        %940 = vmatpush1.bf16.msra.mxu0 %v725
        %941 = vmatprep.subr.bf16.mxu0 0
        %942 = vmatpush1.bf16.msra.mxu0 %v726
        %943 = vmatprep.subr.bf16.mxu0 0
        %944 = vmatpush1.bf16.msra.mxu0 %v727
        %945 = vmatprep.subr.bf16.mxu0 0
        %946 = vmatpush1.bf16.msra.mxu0 %v728
        %947 = vmatprep.subr.bf16.mxu0 0
        %948 = vmatpush1.bf16.msra.mxu0 %v729
        %949 = vmatprep.mubr.bf16.mxu0 %v401
        %950 = vmatmul.mubr.bf16.gmra.mrb[0].mxu0 %v400
        %v951 = vpop.f32.mrb[0].mxu0
        %v952 = vadd.f32 %v911, %v951
        %v953 = vpop.f32.mrb[0].mxu0
        %v954 = vpop.f32.mrb[0].mxu0
        %v955 = vadd.f32 %v914, %v954
        %v956 = vpop.f32.mrb[0].mxu0
        %957 = vdwg.mxu0
        %v958 = vadd.f32 %v232, %v952
        %v959 = vadd.f32 %v233, %v955
        %960 = vst [vmem:[#allocation2] sm:$0xff] %v958
        %961 = vst [vmem:[#allocation2 + $0x8] sm:$0xff] %v959
        // Predicated region
        $region37: #{fwd.1} parent=31 // pred_check
          %p962 = pneg %p226
        $region38: #{fwd.1} parent=31 // pred_check_branch
          %964 = sbr.rel (%p962) target = $region40
        $region39: #{fwd.1} parent=31 // pred_region
          %v965 = vld [vmem:[%s2] sm:$0x1]
          %v966 = vld [vmem:[%s2 + $0x1] sm:$0x1]
          %v967 = vld [vmem:[%s2 + $0x2] sm:$0x1]
          %v968 = vld [vmem:[#allocation2] sm:$0xff]
          %v969 = vld [vmem:[#allocation2 + $0x8] sm:$0xff]
          %v970 = vlaneseq
          %v971 = vshrl.u32 %v970, 7
          %v972 = vsub.s32 0, %v971
          %v973 = vrot.slane %v965, %v972
          %v974 = vadd.f32 %v968, %v973
          %v975 = vadd.f32 %v969, %v973
          %976 = vadd.xlane.f32.xlu0 %v974
          %v977 = vpop.xlane.xlu0 %976
          %978 = vadd.xlane.f32.xlu0 %v975
          %v979 = vpop.xlane.xlu0 %978
          %v980 = vmul.f32 %v974, %v974
          %v981 = vmul.f32 %v975, %v975
          %982 = vadd.xlane.f32.xlu0 %v980
          %v983 = vpop.xlane.xlu0 %982
          %984 = vadd.xlane.f32.xlu0 %v981
          %v985 = vpop.xlane.xlu0 %984
          %v986 = vmul.f32 %v977, 0.03125
          %v987 = vmul.f32 %v979, 0.03125
          %v988 = vmul.f32 %v983, 0.03125
          %v989 = vmul.f32 %v985, 0.03125
          %v990 = vmul.f32 %v986, %v986
          %v991 = vmul.f32 %v987, %v987
          %v992 = vsub.f32 %v988, %v990
          %v993 = vsub.f32 %v989, %v991
          %v994 = vmax.f32 %v992, 0.0
          %v995 = vmax.f32 %v993, 0.0
          %v996 = vsub.f32 %v974, %v986
          %v997 = vsub.f32 %v975, %v987
          %v998 = vadd.f32 %v994, 1e-05
          %v999 = vadd.f32 %v995, 1e-05
          %v1000 = vrsqrt.pop %v998
          %v1001 = vrsqrt.pop %v999
          %v1002 = vmul.f32 %v996, %v1000
          %v1003 = vmul.f32 %v997, %v1001
          %v1004 = vlaneseq
          %v1005 = vshrl.u32 %v1004, 7
          %v1006 = vsub.s32 0, %v1005
          %v1007 = vrot.slane %v966, %v1006
          %v1008 = vmul.f32 %v1002, %v1007
          %v1009 = vmul.f32 %v1003, %v1007
          %v1010 = vlaneseq
          %v1011 = vshrl.u32 %v1010, 7
          %v1012 = vsub.s32 0, %v1011
          %v1013 = vrot.slane %v967, %v1012
          %v1014 = vadd.f32 %v1008, %v1013
          %v1015 = vadd.f32 %v1009, %v1013
          %v1016 = vpack.c.bf16 %v1015, %v1014
          %v1018 = vunpack.c.l.b16 %v1016
          %v1019 = vunpack.c.h.b16 %v1016
          %v1020 = vpack.c.b16 %v1018, %v1018
          %v1021 = vpack.c.b16 %v1019, %v1019
          %1024 = vst [vmem:[%s205] sm:$0xf] %v1020
          %1025 = vst [vmem:[%s205 + $0x4] sm:$0xf] %v1021
        $region40: #{fwd.1} parent=31 // pred_fallthru
          _
        %s1026 = sand.u32 %s112, 1
        %s1027 = scalar_lea.sflag [#allocation4], %s1026
        %s1028 = sand.u32 %s112, 1
        %s1029 = smul.addr %s1028, 8
        %s1030 = scalar_lea.vmem [#allocation3], %s1029
        // Predicated region
        $region41: #{fwd.1} parent=31 // pred_check
          %p1031 = pneg %p122
        $region42: #{fwd.1} parent=31 // pred_check_branch
          %1033 = sbr.rel (%p1031) target = $region44
        $region43: #{fwd.1} parent=31 // pred_region
          %s1034 = smul.u32 2, %s21
          %s1036 = ssub.s32 128, 128
          %1037 = vsyncadd %s1027, %s1036
          %s1038 = smul.addr %s1034, 64
          %s1039 = scalar_lea.hbm %s3, %s1038
          %s1040 = sshll.u32 %s1030, 4
          %s1041 = int_to_ptr.vmem [resolvable:$true] %s1040
          %1046 = dma.vmem_to_hbm [thread:$0]  %s1041, 128, %s1039, %s1027, 64, 64, 4
        $region44: #{fwd.1} parent=31 // pred_fallthru
          _
      $region32: #{fwd.1} parent=5 // pred_fallthru
        _
      %p1047 = scmp.le.s32.totalorder 2, %s12
      // Predicated region
      $region45: #{fwd.1} parent=5 // pred_check
        %p1048 = pneg %p1047
      $region46: #{fwd.1} parent=5 // pred_check_branch
        %1050 = sbr.rel (%p1048) target = $region48
      $region47: #{fwd.1} parent=5 // pred_region
        %s1051 = ssub.s32 %s12, 2
        // Predicated region
        $region49: #{fwd.1} parent=47 // pred_check
          %p1052 = pneg %p128
        $region50: #{fwd.1} parent=47 // pred_check_branch
          %1054 = sbr.rel (%p1052) target = $region52
        $region51: #{fwd.1} parent=47 // pred_region
          %s1055 = sand.u32 %s113, 1
          %s1056 = scalar_lea.sflag [#allocation4], %s1055
          %s1057 = sand.u32 %s113, 1
          %s1058 = smul.addr %s1057, 8
          %s1059 = scalar_lea.vmem [#allocation3], %s1058
          %1060 = dma.done %s1056, 128
        $region52: #{fwd.1} parent=47 // pred_fallthru
          _
      $region48: #{fwd.1} parent=5 // pred_fallthru
        _
    $region6: #{fwd.1} parent=1 // loop_footer
      %s16 = sadd.s32 1, %s12
    $region7: #{fwd.1} parent=1 // loop_footer_branch
      %11 = sbr.rel target = $region3
    $region8: #{fwd.1} parent=1 // loop_exit
      _
    %1061 = vsyncpa [#allocation4], 1
    %s1062 = scalar_lea.sflag [#allocation4], 1
    %1063 = vsyncpa %s1062, 1

</llo_original>
